<compile_context>
chip_gen: v7x
topology: tpu7x:2x2x1
jax: 0.10.0
libtpu: 0.0.40
codegen_flags: <defaults>
</compile_context>

<pallas_src>
import math
import random

import numpy as np
import jax
import jax.numpy as jnp
from jax.experimental import pallas as pl
from jax.experimental.pallas import tpu as pltpu

SQRT2 = math.sqrt(2.0)
LRELU_SLOPE = 0.2
VMEM_LIMIT = 64 * 1024 * 1024          # safe on v5e/v6e (128 MiB) and v7x (64 MiB)
_MXU_DTYPE = jnp.bfloat16              # MXU operand dtype (f32 accumulation)

_BLUR_1D = np.array([1.0, 3.0, 3.0, 1.0], dtype=np.float64)
_BLUR_2D = np.outer(_BLUR_1D, _BLUR_1D)
_BLUR_2D = _BLUR_2D / _BLUR_2D.sum()           # make_kernel([1, 3, 3, 1])
BLUR_UP_K = _BLUR_2D * 4.0                     # * upsample_factor ** 2


def _vmem():
    return pl.BlockSpec(memory_space=pltpu.MemorySpace.VMEM)


# ----------------------------------------------------------------------------
# Small dense kernels (style MLP / modulation linears / demod coefficients)
# ----------------------------------------------------------------------------
def _pixelnorm_kernel(x_ref, o_ref):
    x = x_ref[...]
    o_ref[...] = x * jax.lax.rsqrt(jnp.mean(x * x, axis=1, keepdims=True) + 1e-8)


def _eqlinear_kernel(x_ref, w_ref, b_ref, o_ref):
    o_ref[...] = (jnp.dot(x_ref[...], w_ref[...],
                          preferred_element_type=jnp.float32) + b_ref[...])


def _eqlinear_act_kernel(x_ref, w_ref, b_ref, o_ref):
    y = jnp.dot(x_ref[...], w_ref[...],
                preferred_element_type=jnp.float32) + b_ref[...]
    o_ref[...] = jnp.where(y >= 0.0, y, LRELU_SLOPE * y) * SQRT2


def _demod_kernel(s_ref, a_ref, o_ref):
    # demod[b, o] = rsqrt(sum_i style[b,i]^2 * A[i,o] + eps)
    s = s_ref[...]
    o_ref[...] = jax.lax.rsqrt(
        jnp.dot(s * s, a_ref[...], preferred_element_type=jnp.float32) + 1e-8)


# ----------------------------------------------------------------------------
# Fused modulated-conv kernels
# ----------------------------------------------------------------------------
def _conv3x3_kernel(xp_ref, w_ref, s_ref, d_ref, n_ref, b_ref, o_ref):
    """Fused 3x3 modulated conv ('same') + demod + noise + bias + fused lrelu.

    xp_ref : (1, H+2, W+2, Cin)   padded input, resident per batch element
    w_ref  : (9, Cin, Cout)       scale * w, tap-major
    s_ref  : (1, Cin, 1)          per-sample style (modulation)
    d_ref  : (1, 1, Cout)         per-sample demodulation
    n_ref  : (1, TH*W, 1)         per-pixel noise * noise_weight (this tile)
    b_ref  : (1, Cout)            activation bias
    o_ref  : (1, TH*W, Cout)      output tile (flat pixels)
    """
    cin = xp_ref.shape[3]
    wd = xp_ref.shape[2] - 2
    cout = o_ref.shape[2]
    th = o_ref.shape[1] // wd
    row0 = pl.program_id(1) * th

    style = s_ref[0]                       # (Cin, 1)  -> broadcasts over Cout
    demod = d_ref[0]                       # (1, Cout) -> broadcasts over Cin

    acc = jnp.zeros((th * wd, cout), jnp.float32)
    for dy in range(3):
        for dx in range(3):
            wt = (w_ref[dy * 3 + dx] * style * demod).astype(_MXU_DTYPE)
            xs = xp_ref[0, pl.ds(row0 + dy, th), pl.ds(dx, wd), :]
            acc = acc + jnp.dot(xs.reshape(th * wd, cin).astype(_MXU_DTYPE),
                                wt, preferred_element_type=jnp.float32)

    y = acc + n_ref[0] + b_ref[...]
    o_ref[0] = jnp.where(y >= 0.0, y, LRELU_SLOPE * y) * SQRT2


def _conv3x3_up_kernel(xp_ref, w_ref, s_ref, d4_ref, n_ref, b_ref, o_ref):
    """Fused stride-2 transposed conv + [1,3,3,1] blur (polyphase) + epilogue.

    xp_ref : (1, H+2, W+2, Cin)        padded low-res input
    w_ref  : (9, Cin, 4*Cout)          composite (convT ∘ blur) phase weights
    s_ref  : (1, Cin, 1)               per-sample style
    d4_ref : (1, 1, 4*Cout)            per-sample demod tiled over the 4 phases
    n_ref  : (1, 2, 2, TH*W, 1)        phase-split noise * noise_weight
    b_ref  : (1, Cout)                 activation bias
    o_ref  : (1, TH, 2, W, 2*Cout)     output tile; reshape -> (2*TH, 2*W, Cout)
    """
    cin = xp_ref.shape[3]
    th = o_ref.shape[1]
    wd = o_ref.shape[3]
    cout = o_ref.shape[4] // 2
    row0 = pl.program_id(1) * th

    style = s_ref[0]                       # (Cin, 1)
    demod4 = d4_ref[0]                     # (1, 4*Cout)

    acc = jnp.zeros((th * wd, 4 * cout), jnp.float32)
    for dy in range(3):
        for dx in range(3):
            wt = (w_ref[dy * 3 + dx] * style * demod4).astype(_MXU_DTYPE)
            xs = xp_ref[0, pl.ds(row0 + dy, th), pl.ds(dx, wd), :]
            acc = acc + jnp.dot(xs.reshape(th * wd, cin).astype(_MXU_DTYPE),
                                wt, preferred_element_type=jnp.float32)

    bias = b_ref[...]                      # (1, Cout)
    for pr in range(2):
        for pc in range(2):
            ph = 2 * pr + pc
            y = acc[:, ph * cout:(ph + 1) * cout] + n_ref[0, pr, pc] + bias
            y = jnp.where(y >= 0.0, y, LRELU_SLOPE * y) * SQRT2
            o_ref[0, :, pr, :, pc * cout:(pc + 1) * cout] = (
                y.reshape(th, wd, cout))


def _torgb_kernel(x_ref, w_ref, s_ref, b_ref, o_ref):
    wmod = (w_ref[...] * s_ref[0]).astype(_MXU_DTYPE)          # (Cin, 3)
    y = jnp.dot(x_ref[0].astype(_MXU_DTYPE), wmod,
                preferred_element_type=jnp.float32)             # (TP, 3)
    o_ref[0] = y + b_ref[...]


def _torgb_skip_kernel(x_ref, w_ref, s_ref, b_ref, k_ref, o_ref):
    wmod = (w_ref[...] * s_ref[0]).astype(_MXU_DTYPE)
    y = jnp.dot(x_ref[0].astype(_MXU_DTYPE), wmod,
                preferred_element_type=jnp.float32)
    o_ref[0] = y + b_ref[...] + k_ref[0]


def _make_blur_kernel(h_out, w_out, coefs):
    """4x4 upfirdn blur over an (already padded) NHWC slab (skip path only)."""
    kh, kw = coefs.shape
    cf = [[float(coefs[i, j]) for j in range(kw)] for i in range(kh)]

    def kern(xp_ref, o_ref):
        acc = None
        for dy in range(kh):
            for dx in range(kw):
                t = xp_ref[0, dy:dy + h_out, dx:dx + w_out, :] * cf[dy][dx]
                acc = t if acc is None else acc + t
        o_ref[0] = acc
    return kern


# ----------------------------------------------------------------------------
# Host-side glue / pallas_call wrappers
# ----------------------------------------------------------------------------
def pixel_norm(x):
    return pl.pallas_call(
        _pixelnorm_kernel,
        out_shape=jax.ShapeDtypeStruct(x.shape, jnp.float32),
        in_specs=[_vmem()], out_specs=_vmem(),
    )(x)


def equal_linear(x, weight, bias, lr_mul=1.0, activation=False):
    out_dim, in_dim = weight.shape
    scale = (1.0 / math.sqrt(in_dim)) * lr_mul
    w_eff = (weight * scale).T                       # (in, out)
    b_eff = (bias * lr_mul).reshape(1, out_dim)
    kern = _eqlinear_act_kernel if activation else _eqlinear_kernel
    return pl.pallas_call(
        kern,
        out_shape=jax.ShapeDtypeStruct((x.shape[0], out_dim), jnp.float32),
        in_specs=[_vmem(), _vmem(), _vmem()], out_specs=_vmem(),
    )(x, w_eff, b_eff)


def style_mlp(z, mlp_params, lr_mlp=0.01):
    x = pixel_norm(z)
    for w, b in mlp_params:
        x = equal_linear(x, w, b, lr_mul=lr_mlp, activation=True)
    return x


def _demodulation(style, weight, scale):
    # A[i, o] = scale^2 * sum_{ky,kx} w[o, i, ky, kx]^2
    a = ((scale * weight) ** 2).sum(axis=(2, 3)).T   # (Cin, Cout)
    b = style.shape[0]
    cout = a.shape[1]
    return pl.pallas_call(
        _demod_kernel,
        out_shape=jax.ShapeDtypeStruct((b, cout), jnp.float32),
        in_specs=[_vmem(), _vmem()], out_specs=_vmem(),
    )(style, a)


def _row_tile(h, w, cout, phases, budget=2 * 1024 * 1024):
    """Rows per grid step so the f32 output tile stays ~`budget` bytes."""
    per_row = max(1, w * cout * 4 * phases)
    rows = max(1, budget // per_row)
    if rows >= h:
        return h
    th = 8
    while th * 2 <= rows and th * 2 <= h:
        th *= 2
    return min(th, h)


def _upsample_phase_matrix():
    # M[pr,pc,s,t,dy,dx] = blur coefficient linking flipped-kernel tap (dy,dx)
    # to the 3x3 input offset (s-1, t-1) of output phase (pr, pc).
    m = np.zeros((2, 2, 3, 3, 3, 3), dtype=np.float32)
    for pr in range(2):
        for pc in range(2):
            for s in range(3):
                for t in range(3):
                    for dy in range(3):
                        by = 2 * s + 1 - pr - dy
                        if by < 0 or by > 3:
                            continue
                        for dx in range(3):
                            bx = 2 * t + 1 - pc - dx
                            if bx < 0 or bx > 3:
                                continue
                            m[pr, pc, s, t, dy, dx] = BLUR_UP_K[by, bx]
    return m


_UP_PHASE_M = _upsample_phase_matrix()


def _pack_upsample_weight(w, scale):
    """(Cout, Cin, 3, 3) -> (9, Cin, 4*Cout) composite convT∘blur phase weights."""
    cout, cin = w.shape[0], w.shape[1]
    w_flip = (scale * w)[:, :, ::-1, ::-1]     # fw[dy,dx] = scale*w[..., 2-dy, 2-dx]
    weff = jnp.einsum('pqstyx,oiyx->stipqo', _UP_PHASE_M, w_flip)
    return weff.reshape(9, cin, 4 * cout)


def styled_conv(x, latent, p, upsample, noise):
    """StyledConv = ModulatedConv2d(3x3) + NoiseInjection + FusedLeakyReLU."""
    b, h, w, cin = x.shape
    cout = p['w'].shape[0]
    scale = 1.0 / math.sqrt(cin * 9)

    style = equal_linear(latent, p['mod_w'], p['mod_b'])          # (B, Cin)
    demod = _demodulation(style, p['w'], scale)                   # (B, Cout)
    style_col = style.reshape(b, cin, 1)
    xp = jnp.pad(x, ((0, 0), (1, 1), (1, 1), (0, 0)))
    bias_row = p['act_bias'].reshape(1, cout)
    cparams = pltpu.CompilerParams(
        dimension_semantics=("parallel", "arbitrary"),
        vmem_limit_bytes=VMEM_LIMIT)

    if not upsample:
        th = _row_tile(h, w, cout, phases=1)
        w9 = (scale * p['w']).transpose(2, 3, 1, 0).reshape(9, cin, cout)
        demod_row = demod.reshape(b, 1, cout)
        noise_flat = (p['noise_w'] * noise).reshape(b, h * w, 1)
        out = pl.pallas_call(
            _conv3x3_kernel,
            out_shape=jax.ShapeDtypeStruct((b, h * w, cout), jnp.float32),
            grid=(b, h // th),
            in_specs=[
                pl.BlockSpec((1, h + 2, w + 2, cin), lambda i, t: (i, 0, 0, 0)),
                pl.BlockSpec((9, cin, cout), lambda i, t: (0, 0, 0)),
                pl.BlockSpec((1, cin, 1), lambda i, t: (i, 0, 0)),
                pl.BlockSpec((1, 1, cout), lambda i, t: (i, 0, 0)),
                pl.BlockSpec((1, th * w, 1), lambda i, t: (i, t, 0)),
                pl.BlockSpec((1, cout), lambda i, t: (0, 0)),
            ],
            out_specs=pl.BlockSpec((1, th * w, cout), lambda i, t: (i, t, 0)),
            compiler_params=cparams,
        )(xp, w9, style_col, demod_row, noise_flat, bias_row)
        return out.reshape(b, h, w, cout)

    # Upsample path: polyphase transposed conv fused with the blur.
    hf, wf = 2 * h, 2 * w
    th = _row_tile(h, w, cout, phases=4)
    w_up = _pack_upsample_weight(p['w'], scale)                   # (9, Cin, 4*Cout)
    demod4 = jnp.tile(demod, (1, 4)).reshape(b, 1, 4 * cout)
    noise4 = ((p['noise_w'] * noise).reshape(b, h, 2, w, 2)
              .transpose(0, 2, 4, 1, 3).reshape(b, 2, 2, h * w, 1))
    out6 = pl.pallas_call(
        _conv3x3_up_kernel,
        out_shape=jax.ShapeDtypeStruct((b, h, 2, w, 2 * cout), jnp.float32),
        grid=(b, h // th),
        in_specs=[
            pl.BlockSpec((1, h + 2, w + 2, cin), lambda i, t: (i, 0, 0, 0)),
            pl.BlockSpec((9, cin, 4 * cout), lambda i, t: (0, 0, 0)),
            pl.BlockSpec((1, cin, 1), lambda i, t: (i, 0, 0)),
            pl.BlockSpec((1, 1, 4 * cout), lambda i, t: (i, 0, 0)),
            pl.BlockSpec((1, 2, 2, th * w, 1), lambda i, t: (i, 0, 0, t, 0)),
            pl.BlockSpec((1, cout), lambda i, t: (0, 0)),
        ],
        out_specs=pl.BlockSpec((1, th, 2, w, 2 * cout),
                               lambda i, t: (i, t, 0, 0, 0)),
        compiler_params=cparams,
    )(xp, w_up, style_col, demod4, noise4, bias_row)
    # (B, H, 2, W, 2*Cout) -> (B, 2H, 2W, Cout): pure (free) reshape.
    return out6.reshape(b, hf, wf, cout)


def _zero_upsample(x):
    # interleave zeros after every row / column: (B, H, W, C) -> (B, 2H, 2W, C)
    b, h, w, c = x.shape
    z = jnp.stack([x, jnp.zeros_like(x)], axis=2).reshape(b, 2 * h, w, c)
    z = jnp.stack([z, jnp.zeros_like(z)], axis=3).reshape(b, 2 * h, 2 * w, c)
    return z


def upsample_2x(x):
    """Upsample(blur_kernel) = upfirdn2d(x, k*4, up=2, pad=(2, 1)); skip path (3ch)."""
    b, h, w, c = x.shape
    z = _zero_upsample(x)
    zp = jnp.pad(z, ((0, 0), (2, 1), (2, 1), (0, 0)))
    hf, wf = 2 * h, 2 * w
    kern = _make_blur_kernel(hf, wf, BLUR_UP_K)
    return pl.pallas_call(
        kern,
        out_shape=jax.ShapeDtypeStruct((b, hf, wf, c), jnp.float32),
        grid=(b,),
        in_specs=[pl.BlockSpec((1, hf + 3, wf + 3, c), lambda i: (i, 0, 0, 0))],
        out_specs=pl.BlockSpec((1, hf, wf, c), lambda i: (i, 0, 0, 0)),
        compiler_params=pltpu.CompilerParams(
            dimension_semantics=("parallel",), vmem_limit_bytes=VMEM_LIMIT),
    )(zp)


def to_rgb(x, latent, p, skip):
    """ToRGB = ModulatedConv2d(1x1, demodulate=False) + bias [+ upsampled skip]."""
    b, h, w, cin = x.shape
    scale = 1.0 / math.sqrt(cin)
    style = equal_linear(latent, p['mod_w'], p['mod_b'])           # (B, Cin)
    style_col = style.reshape(b, cin, 1)
    w_t = (scale * p['w'][:, :, 0, 0]).T                           # (Cin, 3)
    bias_row = p['bias'].reshape(1, 3)
    P = h * w
    TP = P if P <= 4096 else 4096
    x_flat = x.reshape(b, P, cin)
    cparams = pltpu.CompilerParams(
        dimension_semantics=("parallel", "arbitrary"),
        vmem_limit_bytes=VMEM_LIMIT)
    base_specs = [
        pl.BlockSpec((1, TP, cin), lambda i, t: (i, t, 0)),
        pl.BlockSpec((cin, 3), lambda i, t: (0, 0)),
        pl.BlockSpec((1, cin, 1), lambda i, t: (i, 0, 0)),
        pl.BlockSpec((1, 3), lambda i, t: (0, 0)),
    ]
    out_spec = pl.BlockSpec((1, TP, 3), lambda i, t: (i, t, 0))

    if skip is None:
        out = pl.pallas_call(
            _torgb_kernel,
            out_shape=jax.ShapeDtypeStruct((b, P, 3), jnp.float32),
            grid=(b, P // TP),
            in_specs=base_specs, out_specs=out_spec,
            compiler_params=cparams,
        )(x_flat, w_t, style_col, bias_row)
    else:
        skip_flat = upsample_2x(skip).reshape(b, P, 3)
        out = pl.pallas_call(
            _torgb_skip_kernel,
            out_shape=jax.ShapeDtypeStruct((b, P, 3), jnp.float32),
            grid=(b, P // TP),
            in_specs=base_specs + [pl.BlockSpec((1, TP, 3), lambda i, t: (i, t, 0))],
            out_specs=out_spec,
            compiler_params=cparams,
        )(x_flat, w_t, style_col, bias_row, skip_flat)
    return out.reshape(b, h, w, 3)


# ----------------------------------------------------------------------------
# Parameter construction (deterministic, synthetic)
# ----------------------------------------------------------------------------
def make_channels(channel_multiplier=2, base=512):
    return {4: base, 8: base, 16: base, 32: base,
            64: base // 2 * channel_multiplier,
            128: base // 4 * channel_multiplier,
            256: base // 8 * channel_multiplier,
            512: base // 16 * channel_multiplier,
            1024: base // 32 * channel_multiplier}


def init_layer_swap_generator(key, size, style_dim, n_mlp,
                              channel_multiplier=2, lr_mlp=0.01,
                              channel_base=512):
    channels = make_channels(channel_multiplier, channel_base)
    log_size = int(math.log2(size))
    num_layers = (log_size - 2) * 2 + 1
    n_latent = log_size * 2 - 2

    kit = iter(jax.random.split(key, 8 * num_layers + 4 * n_mlp + 64))
    nk = lambda: next(kit)

    mlp = []
    for _ in range(n_mlp):
        w = jax.random.normal(nk(), (style_dim, style_dim), jnp.float32) / lr_mlp
        b = jnp.zeros((style_dim,), jnp.float32)
        mlp.append((w, b))

    c4 = channels[4]
    const = jax.random.normal(nk(), (1, 4, 4, c4), jnp.float32)   # NHWC constant

    def styled_conv_p(cin, cout):
        return dict(
            w=jax.random.normal(nk(), (cout, cin, 3, 3), jnp.float32),
            mod_w=jax.random.normal(nk(), (cin, style_dim), jnp.float32),
            mod_b=jnp.ones((cin,), jnp.float32),                  # bias_init=1
            act_bias=jnp.zeros((cout,), jnp.float32),
            noise_w=jnp.float32(0.0),   # matches torch NoiseInjection init (0)
        )

    def torgb_p(cin):
        return dict(
            w=jax.random.normal(nk(), (3, cin, 1, 1), jnp.float32),
            mod_w=jax.random.normal(nk(), (cin, style_dim), jnp.float32),
            mod_b=jnp.ones((cin,), jnp.float32),
            bias=jnp.zeros((3,), jnp.float32),
        )

    conv1 = styled_conv_p(c4, c4)
    to_rgb1 = torgb_p(c4)
    convs, to_rgbs = [], []
    in_ch = c4
    for i in range(3, log_size + 1):
        out_ch = channels[2 ** i]
        convs.append(styled_conv_p(in_ch, out_ch))   # upsample conv
        convs.append(styled_conv_p(out_ch, out_ch))  # plain conv
        to_rgbs.append(torgb_p(out_ch))
        in_ch = out_ch

    noises = []
    for layer_idx in range(num_layers):
        res = (layer_idx + 5) // 2
        noises.append(jax.random.normal(nk(), (1, 2 ** res, 2 ** res, 1), jnp.float32))

    params = dict(mlp=mlp, const=const, conv1=conv1, to_rgb1=to_rgb1,
                  convs=convs, to_rgbs=to_rgbs, noises=noises)
    cfg = dict(size=size, style_dim=style_dim, lr_mlp=lr_mlp, log_size=log_size,
               num_layers=num_layers, n_latent=n_latent, channels=channels)
    return params, cfg


# ----------------------------------------------------------------------------
# Forward pass (mirrors LayerSwapGenerator.forward)
# ----------------------------------------------------------------------------
def layer_swap_generator_forward(
        params, cfg, styles,
        return_latents=False, inject_index=None, truncation=1.0,
        truncation_latent=None, input_is_latent=False, input_is_w_plus=False,
        noise=None, randomize_noise=True,
        feature_out=None, feature_skip=None, feature_loc=(-1, -1),
        need_skip=(False, False), noise_key=None):
    n_latent = cfg['n_latent']
    num_layers = cfg['num_layers']

    if (not input_is_latent) and (not input_is_w_plus):
        styles = [style_mlp(s, params['mlp'], cfg['lr_mlp']) for s in styles]

    batch = styles.shape[0] if input_is_w_plus else styles[0].shape[0]

    if noise is None:
        if randomize_noise:
            key = noise_key if noise_key is not None else jax.random.PRNGKey(1234)
            nkeys = jax.random.split(key, num_layers)
            noise = []
            for li in range(num_layers):
                res = (li + 5) // 2
                noise.append(jax.random.normal(
                    nkeys[li], (batch, 2 ** res, 2 ** res, 1), jnp.float32))
        else:
            noise = [jnp.broadcast_to(n, (batch,) + n.shape[1:])
                     for n in params['noises']]

    if input_is_w_plus:
        latent = styles
    else:
        if truncation < 1:
            styles = [truncation_latent + truncation * (s - truncation_latent)
                      for s in styles]
        if len(styles) < 2:
            inject_index = n_latent
            if styles[0].ndim < 3:
                latent = jnp.repeat(styles[0][:, None, :], inject_index, axis=1)
            else:
                latent = styles[0]
        elif len(styles) == n_latent:
            latent = jnp.concatenate([s[:, None, :] for s in styles], axis=1)
        else:
            if inject_index is None:
                # NOTE: sampled at trace time (behavioral divergence from torch).
                inject_index = random.randint(1, n_latent - 1)
            l1 = jnp.repeat(styles[0][:, None, :], inject_index, axis=1)
            l2 = jnp.repeat(styles[1][:, None, :], n_latent - inject_index, axis=1)
            latent = jnp.concatenate([l1, l2], axis=1)

    out, skip = feature_out, feature_skip
    if feature_out is None:
        out = jnp.broadcast_to(params['const'], (batch,) + params['const'].shape[1:])
        out = styled_conv(out, latent[:, 0], params['conv1'],
                          upsample=False, noise=noise[0])
    if (not need_skip[1]) and feature_loc[1] == 0:
        return out, None
    if (not need_skip[0]) and feature_loc[0] == 0:
        out, skip = feature_out, feature_skip
    if feature_skip is None:
        skip = to_rgb(out, latent[:, 1], params['to_rgb1'], skip=None)
    if need_skip[1] and feature_loc[1] == 0:
        return out, skip
    if need_skip[0] and feature_loc[0] == 0:
        out, skip = feature_out, feature_skip

    i = 1
    for j in range(len(params['to_rgbs'])):
        conv_up_p = params['convs'][2 * j]
        conv_p = params['convs'][2 * j + 1]
        noise1 = noise[1 + 2 * j]
        noise2 = noise[2 + 2 * j]
        to_rgb_p = params['to_rgbs'][j]
        if j + 1 < feature_loc[0]:
            i += 2
            continue
        if not (j + 1 == feature_loc[0]):
            out = styled_conv(out, latent[:, i], conv_up_p, upsample=True, noise=noise1)
            out = styled_conv(out, latent[:, i + 1], conv_p, upsample=False, noise=noise2)
        if (not need_skip[1]) and feature_loc[1] == j + 1:
            return out, skip
        if (not need_skip[0]) and feature_loc[0] == j + 1:
            out, skip = feature_out, feature_skip
        if (not (j + 1 == feature_loc[0])) or (not need_skip[0]):
            skip = to_rgb(out, latent[:, i + 2], to_rgb_p, skip=skip)
        if need_skip[1] and feature_loc[1] == j + 1:
            return out, skip
        if need_skip[0] and feature_loc[0] == j + 1:
            out, skip = feature_out, feature_skip
        i += 2

    image = skip
    if return_latents:
        return image, latent
    return image, None


# ----------------------------------------------------------------------------
if __name__ == "__main__":
    size = 16           # 16x16 RGB output; log_size=4 -> 5 styled convs, 3 ToRGBs
    style_dim = 32
    n_mlp = 2
    batch = 2
    channel_base = 64   # real StyleGAN2 uses 512; scaled down for a small test

    root = jax.random.PRNGKey(0)
    pkey, zkey = jax.random.split(root)
    params, cfg = init_layer_swap_generator(pkey, size, style_dim, n_mlp,
                                            channel_base=channel_base)

    z = jax.random.normal(zkey, (batch, style_dim), jnp.float32)
    image, _ = layer_swap_generator_forward(params, cfg, [z], randomize_noise=False)
    image = jax.block_until_ready(image)

    assert image.shape == (batch, size, size, 3), image.shape
    assert bool(jnp.all(jnp.isfinite(image)))
    print("KERNEL_OK")
</pallas_src>

<mosaic_0001>
module attributes {stable_mosaic.version = 11 : i64} {
  func.func @_pixelnorm_kernel(%arg0: memref<2x32xf32, #tpu.memory_space<vmem>>, %arg1: memref<2x32xf32, #tpu.memory_space<vmem>>) attributes {dimension_semantics = [], scalar_prefetch = 0 : i64, scratch_operands = 0 : i64, tpu.core_type = #tpu.core_type<tc>} {
    %c0 = arith.constant 0 : index
    %c0_0 = arith.constant 0 : index
    %0 = vector.load %arg0[%c0, %c0_0] : memref<2x32xf32, #tpu.memory_space<vmem>>, vector<2x32xf32>
    %1 = arith.mulf %0, %0 : vector<2x32xf32>
    %cst = arith.constant dense<0.000000e+00> : vector<2xf32>
    %2 = vector.multi_reduction <add>, %1, %cst [1] : vector<2x32xf32> to vector<2xf32>
    %3 = vector.shape_cast %2 : vector<2xf32> to vector<2x1xf32>
    %cst_1 = arith.constant 3.200000e+01 : f32
    %4 = vector.broadcast %cst_1 : f32 to vector<2x1xf32>
    %5 = arith.divf %3, %4 : vector<2x1xf32>
    %cst_2 = arith.constant 9.99999993E-9 : f32
    %6 = vector.broadcast %cst_2 : f32 to vector<2x1xf32>
    %7 = arith.addf %5, %6 : vector<2x1xf32>
    %8 = math.rsqrt %7 : vector<2x1xf32>
    %9 = vector.broadcast %8 : vector<2x1xf32> to vector<2x32xf32>
    %10 = arith.mulf %0, %9 : vector<2x32xf32>
    %c0_3 = arith.constant 0 : index
    %c0_4 = arith.constant 0 : index
    %11 = vector.load %arg1[%c0_3, %c0_4] : memref<2x32xf32, #tpu.memory_space<vmem>>, vector<2x32xf32>
    tpu.vector_store %arg1[%c0_3, %c0_4], %10 {strides = array<i32>} : memref<2x32xf32, #tpu.memory_space<vmem>>, vector<2x32xf32>,
    return
  }
}

</mosaic_0001>

<llo_original>
// kernel: tpu_custom_call.1
$region0: #{tpu_custom_call.1}
  #allocation0 [shape = 'u32[]', space=smem, size = 0x4, offset = 0x4, fixed_abs, tag = 'smem constant byte address 0x4 - core index']
  #allocation1 [shape = 'u32[144,128]{1,0:T(1,128)}', space=vmem, size = 0x12000, scoped, tag = 'internal scratch']
  %s0 = inlined_call_operand.hbm [shape: f32[2,32], index: 0, kind: input, shape index: {}]
  %s1 = inlined_call_operand.hbm [shape: f32[2,32], index: 1, kind: output, shape index: {}]
  %s2 = sld [smem:[#allocation0]]
  $region18: #{tpu_custom_call.1} parent=0
    _
  %s4 = ssub.s32 1, %s2
  %s5 = scalar_select 0, %s4, %s2
  $region1: #{tpu_custom_call.1} parent=0
    #allocation2 [shape = 'u8[1024]{0}', space=vmem, size = 0x400, scoped, tag = 'input window, operand 0, single buffered']
    #allocation3 [shape = 's32[1]{0}', space=sflag, size = 0x4, scoped, tag = 'scoped memory for tpu_custom_call.1']
    #allocation4 [shape = 's32[1]{0}', space=sflag, size = 0x4, scoped, tag = 'scoped memory for tpu_custom_call.1']
    #allocation5 [shape = 'u8[1024]{0}', space=vmem, size = 0x400, scoped, tag = 'output window, operand 0, single buffered']
    %6 = vsyncpa [#allocation3], 0
    %7 = vsyncpa [#allocation4], 0
    // Predicated region
    $region2: #{tpu_custom_call.1} parent=1 // pred_check
      _
    $region3: #{tpu_custom_call.1} parent=1 // pred_check_branch
      %9 = sbr.rel (0) target = $region5
    $region4: #{tpu_custom_call.1} parent=1 // pred_region
      %s11 = ssub.s32 32, 32
      %12 = vsyncadd [#allocation3], %s11
      %s14 = sshll.u32 [#allocation2], 4
      %s15 = int_to_ptr.vmem [resolvable:$true] %s14
      %17 = dma.hbm_to_vmem [thread:$0]  %s0, 32, %s15, [#allocation3]
    $region5: #{tpu_custom_call.1} parent=1 // pred_fallthru
      _
    // Predicated region
    $region6: #{tpu_custom_call.1} parent=1 // pred_check
      _
    $region7: #{tpu_custom_call.1} parent=1 // pred_check_branch
      %19 = sbr.rel (0) target = $region9
    $region8: #{tpu_custom_call.1} parent=1 // pred_region
      %20 = dma.done [#allocation3], 32
    $region9: #{tpu_custom_call.1} parent=1 // pred_fallthru
      _
    %v21 = vld [vmem:[#allocation2] sm:$0x3]
    %v22 = vmul.f32 %v21, %v21
    %vm23 = vcmask 254976
    %v24 = vsel %vm23, %v22, 0.0
    %25 = vadd.xlane.f32.xlu0 %v24
    %v26 = vpop.xlane.xlu0 %25
    %v27 = vrcp.pop 32.0
    %v28 = vmul.f32 %v26, %v27
    %v29 = vadd.f32 %v28, 1e-08
    %v30 = vrsqrt.pop %v29
    %v31 = vmul.f32 %v21, %v30
    %32 = vst.msk [vmem:[#allocation5] sm:$0x3] %vm23, %v31
    // Predicated region
    $region10: #{tpu_custom_call.1} parent=1 // pred_check
      _
    $region11: #{tpu_custom_call.1} parent=1 // pred_check_branch
      %34 = sbr.rel (0) target = $region13
    $region12: #{tpu_custom_call.1} parent=1 // pred_region
      %s36 = ssub.s32 32, 32
      %37 = vsyncadd [#allocation4], %s36
      %s39 = sshll.u32 [#allocation5], 4
      %s40 = int_to_ptr.vmem [resolvable:$true] %s39
      %42 = dma.vmem_to_hbm [thread:$0]  %s40, 32, %s1, [#allocation4]
    $region13: #{tpu_custom_call.1} parent=1 // pred_fallthru
      _
    // Predicated region
    $region14: #{tpu_custom_call.1} parent=1 // pred_check
      _
    $region15: #{tpu_custom_call.1} parent=1 // pred_check_branch
      %44 = sbr.rel (0) target = $region17
    $region16: #{tpu_custom_call.1} parent=1 // pred_region
      %45 = dma.done [#allocation4], 32
    $region17: #{tpu_custom_call.1} parent=1 // pred_fallthru
      _
    %46 = vsyncpa [#allocation3], 1
    %47 = vsyncpa [#allocation4], 1

</llo_original>
